<compile_context>
chip_gen: v7x
topology: tpu7x:2x2x1
jax: 0.10.0
libtpu: 0.0.40
codegen_flags: <defaults>
</compile_context>

<pallas_src>
import jax
import jax.numpy as jnp
from jax import lax
from jax.experimental import pallas as pl
from jax.experimental.pallas import tpu as pltpu


def _round_up(a, b):
    return ((a + b - 1) // b) * b


def _choose_tile(hw, w, c, dsize, target_bytes):
    """Pick (t_hw, hp, hw_pad): lane-tile size, halo width, padded HW length."""
    hp = _round_up(w + 1, 128)                 # halo >= one image row + 1, 128-aligned
    hw128 = _round_up(hw, 128)

    # bytes-based tile target: one (1, C, t_hw) block ~= target_bytes
    t = max((target_bytes // max(c * dsize, 1)) // 128 * 128, 128)
    t = max(t, hp)
    # prefer >= 2 tiles per image so the manual DMA pipeline has work to prefetch
    half = (hw128 // 2) // 128 * 128
    if half >= hp:
        t = min(t, half)
    t = min(t, hw128)

    # prefer an exact divisor of HW (multiple of 128, >= hp) near the target:
    # avoids the pad/slice passes in the wrapper entirely.
    best = None
    if hw % 128 == 0:
        d = 128
        while d <= hw:
            if hw % d == 0 and d >= hp and d <= 2 * t:
                if best is None or abs(d - t) < abs(best - t):
                    best = d
            d += 128
    if best is not None:
        t = best

    if t < hp:                                  # pathological (e.g. H == 1): one tile
        t = hw128
    hw_pad = _round_up(hw, t)
    return t, hp, hw_pad


def _make_kernel(c, w, hw, t_hw, hp, big_c):
    e = t_hw + 2 * w            # extent of the horizontal 3-sum we need
    ew = e + 2                  # extent of the x window feeding the 3-sum
    base = hp - w - 1           # column in `ext` holding flat position t0 - w - 1

    def kernel(x_hbm, w_ref, shift_ref, o_ref, ext, sems):
        i = pl.program_id(0)          # batch index
        t = pl.program_id(1)          # HW-tile index
        nt = pl.num_programs(1)
        slot = t & 1
        nslot = 1 - slot

        def start_window(tt, s):
            """Issue the DMAs that fill ext[s] with tile tt's extended window."""
            t0 = pl.multiple_of(tt * t_hw, 128)
            # centre tile (always present)
            pltpu.make_async_copy(
                x_hbm.at[i, :, pl.ds(t0, t_hw)],
                ext.at[s, :, pl.ds(hp, t_hw)],
                sems.at[0, s]).start()

            @pl.when(tt > 0)                          # rows above exist in a prev tile
            def _():
                lsrc = pl.multiple_of(t0 - hp, 128)
                pltpu.make_async_copy(
                    x_hbm.at[i, :, pl.ds(lsrc, hp)],
                    ext.at[s, :, pl.ds(0, hp)],
                    sems.at[1, s]).start()

            @pl.when(tt < nt - 1)                     # rows below exist in a next tile
            def _():
                rsrc = pl.multiple_of(t0 + t_hw, 128)
                pltpu.make_async_copy(
                    x_hbm.at[i, :, pl.ds(rsrc, hp)],
                    ext.at[s, :, pl.ds(hp + t_hw, hp)],
                    sems.at[2, s]).start()

        # prime the 2-slot pipeline on the first tile of each image
        @pl.when(t == 0)
        def _():
            start_window(t, slot)

        # prefetch the next tile's window one grid step ahead (same image only)
        @pl.when(t + 1 < nt)
        def _():
            start_window(t + 1, nslot)

        # wait for this tile's window (wait descriptors only need matching shapes)
        pltpu.make_async_copy(
            x_hbm.at[i, :, pl.ds(0, t_hw)],
            ext.at[slot, :, pl.ds(hp, t_hw)],
            sems.at[0, slot]).wait()

        @pl.when(t > 0)
        def _():
            pltpu.make_async_copy(
                x_hbm.at[i, :, pl.ds(0, hp)],
                ext.at[slot, :, pl.ds(0, hp)],
                sems.at[1, slot]).wait()

        @pl.when(t < nt - 1)
        def _():
            pltpu.make_async_copy(
                x_hbm.at[i, :, pl.ds(0, hp)],
                ext.at[slot, :, pl.ds(hp + t_hw, hp)],
                sems.at[2, slot]).wait()

        # ------------------------------ compute ------------------------------
        t0 = pl.multiple_of(t * t_hw, 128)
        xe = ext[slot].astype(jnp.float32)       # single cast pass over the window

        # x over flat positions [t0 - w - 1, t0 + t_hw + w + 1); zero outside image
        xw = xe[:, base:base + ew]
        kk = lax.broadcasted_iota(jnp.int32, (1, ew), 1)
        pos = kk + (t0 - (w + 1))
        xw = jnp.where(jnp.logical_and(pos >= 0, pos < hw), xw, 0.0)

        # horizontal 3-sum with in-row boundary masks (zero padding left/right)
        xl = xw[:, 0:e]
        xc = xw[:, 1:1 + e]
        xr = xw[:, 2:2 + e]
        wpos = (pos[:, 1:1 + e] + w) % w          # column-within-row of each position
        col = (xc + jnp.where(wpos != 0, xl, 0.0)
                  + jnp.where(wpos != (w - 1), xr, 0.0))

        # vertical 3-sum (rows r-1, r, r+1), /9 (count_include_pad=True)
        pooled = (col[:, 0:t_hw] + col[:, w:w + t_hw]
                  + col[:, 2 * w:2 * w + t_hw]) * (1.0 / 9.0)

        x_tile = xe[:, hp:hp + t_hw]
        edge = x_tile - pooled                    # edge = x - AvgPool(x)

        # 1x1 conv (BN-eval scale folded into the weight) + shift + sigmoid + residual
        if big_c:
            y = jnp.dot(w_ref[...], edge.astype(jnp.bfloat16),
                        preferred_element_type=jnp.float32)
        else:
            y = jnp.dot(w_ref[...], edge, preferred_element_type=jnp.float32)
        y = y + shift_ref[...]
        o_ref[0] = (x_tile + jax.nn.sigmoid(y)).astype(o_ref.dtype)

    return kernel


def edge_enhancer(x_nchw, conv_w, gamma, beta, run_mean, run_var, eps=1e-5,
                  target_block_bytes=1 << 20):
    """x_nchw: (N, C, H, W).  conv_w: (C, C) 1x1 conv weight (bias-free).
    gamma/beta/run_mean/run_var: BatchNorm2d (eval mode) parameters/buffers."""
    n, c, h, w = x_nchw.shape
    hw = h * w
    io_dtype = x_nchw.dtype
    dsize = jnp.dtype(io_dtype).itemsize

    # Free reshape: NCHW -> (N, C, H*W).  No transposes; HW lives on lanes.
    x_flat = x_nchw.reshape(n, c, hw)

    # Fold the BatchNorm (eval) scale into the conv weight; keep only a shift.
    inv_std = (gamma / jnp.sqrt(run_var + eps)).astype(jnp.float32)
    w_folded = conv_w.astype(jnp.float32) * inv_std[:, None]            # (C_out, C_in)
    shift = (beta - run_mean * inv_std).astype(jnp.float32).reshape(c, 1)

    t_hw, hp, hw_pad = _choose_tile(hw, w, c, dsize, target_block_bytes)
    nt = hw_pad // t_hw
    if hw_pad != hw:                         # keep stores lane-dense on awkward H*W
        x_flat = jnp.pad(x_flat, ((0, 0), (0, 0), (0, hw_pad - hw)))

    big_c = c >= 64                          # bf16 MXU operands once the matmul matters
    w_arg = w_folded.astype(jnp.bfloat16) if big_c else w_folded

    kernel = _make_kernel(c, w, hw, t_hw, hp, big_c)

    # VMEM budget: 2-slot ext scratch + double-buffered output blocks + weight
    # block + ~6 f32 full-window compiler temporaries.  Sized to fit v7x's
    # 64 MiB/TC; raise the scoped limit (16/32 MiB default on v5e/v6e) to match.
    vmem_needed = (2 * c * (t_hw + 2 * hp) * dsize
                   + 2 * c * t_hw * dsize
                   + 2 * c * c * w_arg.dtype.itemsize
                   + 6 * c * (t_hw + 2 * hp) * 4)
    vmem_limit = int(min(max(vmem_needed + (8 << 20), 32 << 20), 48 << 20))

    out_pad = pl.pallas_call(
        kernel,
        out_shape=jax.ShapeDtypeStruct((n, c, hw_pad), io_dtype),
        grid=(n, nt),
        in_specs=[
            pl.BlockSpec(memory_space=pl.ANY),               # x stays in HBM (manual DMA)
            pl.BlockSpec((c, c), lambda i, t: (0, 0)),       # folded 1x1 conv weight
            pl.BlockSpec((c, 1), lambda i, t: (0, 0)),       # per-channel BN shift
        ],
        out_specs=pl.BlockSpec((1, c, t_hw), lambda i, t: (i, 0, t)),
        scratch_shapes=[
            pltpu.VMEM((2, c, t_hw + 2 * hp), io_dtype),     # 2-slot extended window
            pltpu.SemaphoreType.DMA((3, 2)),                 # {centre,left,right} x slot
        ],
        compiler_params=pltpu.CompilerParams(
            dimension_semantics=("parallel", "arbitrary"),
            vmem_limit_bytes=vmem_limit),
    )(x_flat, w_arg, shift)

    out = out_pad if hw_pad == hw else out_pad[:, :, :hw]
    return out.reshape(n, c, h, w)


def edge_enhancer_ref(x, conv_w, gamma, beta, run_mean, run_var, eps=1e-5):
    """Pure-JAX reference matching PyTorch semantics (BatchNorm in eval mode)."""
    n, c, h, w = x.shape
    xp = jnp.pad(x, ((0, 0), (0, 0), (1, 1), (1, 1)))
    pooled = sum(xp[:, :, i:i + h, j:j + w] for i in range(3) for j in range(3)) / 9.0
    edge = x - pooled
    y = jnp.einsum("oc,nchw->nohw", conv_w, edge)
    scale = gamma / jnp.sqrt(run_var + eps)
    shift = beta - run_mean * scale
    y = y * scale[None, :, None, None] + shift[None, :, None, None]
    return x + jax.nn.sigmoid(y)


if __name__ == "__main__":
    key = jax.random.PRNGKey(0)
    k_x, k_w, k_g, k_b, k_m, k_v, k_x2 = jax.random.split(key, 7)

    N, C, H, W = 2, 4, 16, 16
    x = jax.random.normal(k_x, (N, C, H, W), dtype=jnp.float32)

    # deterministic synthetic parameters (1x1 conv, no bias; BatchNorm2d buffers)
    conv_w = jax.random.normal(k_w, (C, C), dtype=jnp.float32) * 0.3
    gamma = 1.0 + 0.1 * jax.random.normal(k_g, (C,), dtype=jnp.float32)
    beta = 0.1 * jax.random.normal(k_b, (C,), dtype=jnp.float32)
    run_mean = 0.05 * jax.random.normal(k_m, (C,), dtype=jnp.float32)
    run_var = jnp.abs(jax.random.normal(k_v, (C,), dtype=jnp.float32)) + 0.5

    # 16x16 image -> two 128-lane tiles per image: exercises the halo DMAs,
    # the cross-step prefetch and both boundary masks.
    ref = edge_enhancer_ref(x, conv_w, gamma, beta, run_mean, run_var)
    out = jax.block_until_ready(
        edge_enhancer(x, conv_w, gamma, beta, run_mean, run_var))
    assert out.shape == (N, C, H, W)
    assert jnp.allclose(out, ref, atol=3e-5, rtol=3e-5), "mismatch (16x16, 2 tiles)"

    # Awkward spatial size: H*W = 100 -> padded to 128 lanes inside the wrapper.
    H2 = W2 = 10
    x2 = jax.random.normal(k_x2, (N, C, H2, W2), dtype=jnp.float32)
    ref2 = edge_enhancer_ref(x2, conv_w, gamma, beta, run_mean, run_var)
    out2 = jax.block_until_ready(
        edge_enhancer(x2, conv_w, gamma, beta, run_mean, run_var))
    assert out2.shape == (N, C, H2, W2)
    assert jnp.allclose(out2, ref2, atol=3e-5, rtol=3e-5), "mismatch (10x10, padded)"

    print("KERNEL_OK")
</pallas_src>

<mosaic_0001>
module attributes {stable_mosaic.version = 11 : i64} {
  func.func @kernel(%arg0: i32, %arg1: i32, %arg2: memref<2x4x256xf32, #tpu.memory_space<any>>, %arg3: memref<4x4xf32, #tpu.memory_space<vmem>>, %arg4: memref<4x1xf32, #tpu.memory_space<vmem>>, %arg5: memref<1x4x128xf32, #tpu.memory_space<vmem>>, %arg6: memref<2x4x384xf32, #tpu.memory_space<vmem>>, %arg7: memref<3x2x!tpu.dma_semaphore, #tpu.memory_space<semaphore_mem>>) attributes {dimension_semantics = [#tpu.dimension_semantics<parallel>, #tpu.dimension_semantics<arbitrary>], iteration_bounds = array<i64: 2, 2>, scalar_prefetch = 0 : i64, scratch_operands = 2 : i64, tpu.core_type = #tpu.core_type<tc>, window_params = [{}, {pipeline_mode = #tpu.pipeline_mode<synchronous>, transform_indices = @transform_1, window_bounds = array<i64: 4, 4>}, {pipeline_mode = #tpu.pipeline_mode<synchronous>, transform_indices = @transform_2, window_bounds = array<i64: 4, 1>}, {transform_indices = @transform_3, window_bounds = array<i64: 1, 4, 128>}]} {
    %c1_i32 = arith.constant 1 : i32
    %0 = arith.andi %arg1, %c1_i32 : i32
    %c1_i32_0 = arith.constant 1 : i32
    %1 = arith.subi %c1_i32_0, %0 : i32
    %c0_i32 = arith.constant 0 : i32
    %2 = arith.cmpi eq, %arg1, %c0_i32 : i32
    %3 = arith.extui %2 : i1 to i32
    %c0_i32_1 = arith.constant 0 : i32
    %4 = arith.cmpi ne, %3, %c0_i32_1 : i32
    scf.if %4 {
      %c128_i32_34 = arith.constant 128 : i32
      %99 = arith.muli %arg1, %c128_i32_34 : i32
      %100 = tpu.assume_multiple %99, 128 : i32
      %c0_i32_35 = arith.constant 0 : i32
      %c0_i32_36 = arith.constant 0 : i32
      %101 = tpu.memref_slice %arg2[%arg0, %c0_i32_36, %100] : memref<2x4x256xf32, #tpu.memory_space<any>> -> memref<1x4x128xf32, #tpu.memory_space<any>>
      %102 = tpu.memref_squeeze %101 : memref<1x4x128xf32, #tpu.memory_space<any>> -> memref<4x128xf32, #tpu.memory_space<any>>
      %c0_i32_37 = arith.constant 0 : i32
      %c128_i32_38 = arith.constant 128 : i32
      %103 = tpu.memref_slice %arg6[%0, %c0_i32_37, %c128_i32_38] : memref<2x4x384xf32, #tpu.memory_space<vmem>> -> memref<1x4x128xf32, #tpu.memory_space<vmem>>
      %104 = tpu.memref_squeeze %103 : memref<1x4x128xf32, #tpu.memory_space<vmem>> -> memref<4x128xf32, #tpu.memory_space<vmem>>
      %105 = tpu.memref_slice %arg7[%c0_i32_35, %0] : memref<3x2x!tpu.dma_semaphore, #tpu.memory_space<semaphore_mem>> -> memref<1x1x!tpu.dma_semaphore, #tpu.memory_space<semaphore_mem>>
      %106 = tpu.memref_squeeze %105 : memref<1x1x!tpu.dma_semaphore, #tpu.memory_space<semaphore_mem>> -> memref<!tpu.dma_semaphore, #tpu.memory_space<semaphore_mem>>
      tpu.enqueue_dma source(%102 : memref<4x128xf32, #tpu.memory_space<any>>) target(%104 : memref<4x128xf32, #tpu.memory_space<vmem>>) target_semaphore(%106 : memref<!tpu.dma_semaphore, #tpu.memory_space<semaphore_mem>>)
      %c0_i32_39 = arith.constant 0 : i32
      %107 = arith.cmpi sgt, %arg1, %c0_i32_39 : i32
      %108 = arith.extui %107 : i1 to i32
      %c0_i32_40 = arith.constant 0 : i32
      %109 = arith.cmpi ne, %108, %c0_i32_40 : i32
      scf.if %109 {
        %c128_i32_43 = arith.constant 128 : i32
        %113 = arith.subi %100, %c128_i32_43 : i32
        %114 = tpu.assume_multiple %113, 128 : i32
        %c1_i32_44 = arith.constant 1 : i32
        %c0_i32_45 = arith.constant 0 : i32
        %115 = tpu.memref_slice %arg2[%arg0, %c0_i32_45, %114] : memref<2x4x256xf32, #tpu.memory_space<any>> -> memref<1x4x128xf32, #tpu.memory_space<any>>
        %116 = tpu.memref_squeeze %115 : memref<1x4x128xf32, #tpu.memory_space<any>> -> memref<4x128xf32, #tpu.memory_space<any>>
        %c0_i32_46 = arith.constant 0 : i32
        %c0_i32_47 = arith.constant 0 : i32
        %117 = tpu.memref_slice %arg6[%0, %c0_i32_46, %c0_i32_47] : memref<2x4x384xf32, #tpu.memory_space<vmem>> -> memref<1x4x128xf32, #tpu.memory_space<vmem>>
        %118 = tpu.memref_squeeze %117 : memref<1x4x128xf32, #tpu.memory_space<vmem>> -> memref<4x128xf32, #tpu.memory_space<vmem>>
        %119 = tpu.memref_slice %arg7[%c1_i32_44, %0] : memref<3x2x!tpu.dma_semaphore, #tpu.memory_space<semaphore_mem>> -> memref<1x1x!tpu.dma_semaphore, #tpu.memory_space<semaphore_mem>>
        %120 = tpu.memref_squeeze %119 : memref<1x1x!tpu.dma_semaphore, #tpu.memory_space<semaphore_mem>> -> memref<!tpu.dma_semaphore, #tpu.memory_space<semaphore_mem>>
        tpu.enqueue_dma source(%116 : memref<4x128xf32, #tpu.memory_space<any>>) target(%118 : memref<4x128xf32, #tpu.memory_space<vmem>>) target_semaphore(%120 : memref<!tpu.dma_semaphore, #tpu.memory_space<semaphore_mem>>)
      } else {
      }
      %c1_i32_41 = arith.constant 1 : i32
      %110 = arith.cmpi slt, %arg1, %c1_i32_41 : i32
      %111 = arith.extui %110 : i1 to i32
      %c0_i32_42 = arith.constant 0 : i32
      %112 = arith.cmpi ne, %111, %c0_i32_42 : i32
      scf.if %112 {
        %c128_i32_43 = arith.constant 128 : i32
        %113 = arith.addi %100, %c128_i32_43 : i32
        %114 = tpu.assume_multiple %113, 128 : i32
        %c2_i32_44 = arith.constant 2 : i32
        %c0_i32_45 = arith.constant 0 : i32
        %115 = tpu.memref_slice %arg2[%arg0, %c0_i32_45, %114] : memref<2x4x256xf32, #tpu.memory_space<any>> -> memref<1x4x128xf32, #tpu.memory_space<any>>
        %116 = tpu.memref_squeeze %115 : memref<1x4x128xf32, #tpu.memory_space<any>> -> memref<4x128xf32, #tpu.memory_space<any>>
        %c0_i32_46 = arith.constant 0 : i32
        %c256_i32_47 = arith.constant 256 : i32
        %117 = tpu.memref_slice %arg6[%0, %c0_i32_46, %c256_i32_47] : memref<2x4x384xf32, #tpu.memory_space<vmem>> -> memref<1x4x128xf32, #tpu.memory_space<vmem>>
        %118 = tpu.memref_squeeze %117 : memref<1x4x128xf32, #tpu.memory_space<vmem>> -> memref<4x128xf32, #tpu.memory_space<vmem>>
        %119 = tpu.memref_slice %arg7[%c2_i32_44, %0] : memref<3x2x!tpu.dma_semaphore, #tpu.memory_space<semaphore_mem>> -> memref<1x1x!tpu.dma_semaphore, #tpu.memory_space<semaphore_mem>>
        %120 = tpu.memref_squeeze %119 : memref<1x1x!tpu.dma_semaphore, #tpu.memory_space<semaphore_mem>> -> memref<!tpu.dma_semaphore, #tpu.memory_space<semaphore_mem>>
        tpu.enqueue_dma source(%116 : memref<4x128xf32, #tpu.memory_space<any>>) target(%118 : memref<4x128xf32, #tpu.memory_space<vmem>>) target_semaphore(%120 : memref<!tpu.dma_semaphore, #tpu.memory_space<semaphore_mem>>)
      } else {
      }
    } else {
    }
    %c1_i32_2 = arith.constant 1 : i32
    %5 = arith.addi %arg1, %c1_i32_2 : i32
    %c2_i32 = arith.constant 2 : i32
    %6 = arith.cmpi slt, %5, %c2_i32 : i32
    %7 = arith.extui %6 : i1 to i32
    %c0_i32_3 = arith.constant 0 : i32
    %8 = arith.cmpi ne, %7, %c0_i32_3 : i32
    scf.if %8 {
      %c1_i32_34 = arith.constant 1 : i32
      %99 = arith.addi %arg1, %c1_i32_34 : i32
      %c128_i32_35 = arith.constant 128 : i32
      %100 = arith.muli %99, %c128_i32_35 : i32
      %101 = tpu.assume_multiple %100, 128 : i32
      %c0_i32_36 = arith.constant 0 : i32
      %c0_i32_37 = arith.constant 0 : i32
      %102 = tpu.memref_slice %arg2[%arg0, %c0_i32_37, %101] : memref<2x4x256xf32, #tpu.memory_space<any>> -> memref<1x4x128xf32, #tpu.memory_space<any>>
      %103 = tpu.memref_squeeze %102 : memref<1x4x128xf32, #tpu.memory_space<any>> -> memref<4x128xf32, #tpu.memory_space<any>>
      %c0_i32_38 = arith.constant 0 : i32
      %c128_i32_39 = arith.constant 128 : i32
      %104 = tpu.memref_slice %arg6[%1, %c0_i32_38, %c128_i32_39] : memref<2x4x384xf32, #tpu.memory_space<vmem>> -> memref<1x4x128xf32, #tpu.memory_space<vmem>>
      %105 = tpu.memref_squeeze %104 : memref<1x4x128xf32, #tpu.memory_space<vmem>> -> memref<4x128xf32, #tpu.memory_space<vmem>>
      %106 = tpu.memref_slice %arg7[%c0_i32_36, %1] : memref<3x2x!tpu.dma_semaphore, #tpu.memory_space<semaphore_mem>> -> memref<1x1x!tpu.dma_semaphore, #tpu.memory_space<semaphore_mem>>
      %107 = tpu.memref_squeeze %106 : memref<1x1x!tpu.dma_semaphore, #tpu.memory_space<semaphore_mem>> -> memref<!tpu.dma_semaphore, #tpu.memory_space<semaphore_mem>>
      tpu.enqueue_dma source(%103 : memref<4x128xf32, #tpu.memory_space<any>>) target(%105 : memref<4x128xf32, #tpu.memory_space<vmem>>) target_semaphore(%107 : memref<!tpu.dma_semaphore, #tpu.memory_space<semaphore_mem>>)
      %c0_i32_40 = arith.constant 0 : i32
      %108 = arith.cmpi sgt, %99, %c0_i32_40 : i32
      %109 = arith.extui %108 : i1 to i32
      %c0_i32_41 = arith.constant 0 : i32
      %110 = arith.cmpi ne, %109, %c0_i32_41 : i32
      scf.if %110 {
        %c128_i32_44 = arith.constant 128 : i32
        %114 = arith.subi %101, %c128_i32_44 : i32
        %115 = tpu.assume_multiple %114, 128 : i32
        %c1_i32_45 = arith.constant 1 : i32
        %c0_i32_46 = arith.constant 0 : i32
        %116 = tpu.memref_slice %arg2[%arg0, %c0_i32_46, %115] : memref<2x4x256xf32, #tpu.memory_space<any>> -> memref<1x4x128xf32, #tpu.memory_space<any>>
        %117 = tpu.memref_squeeze %116 : memref<1x4x128xf32, #tpu.memory_space<any>> -> memref<4x128xf32, #tpu.memory_space<any>>
        %c0_i32_47 = arith.constant 0 : i32
        %c0_i32_48 = arith.constant 0 : i32
        %118 = tpu.memref_slice %arg6[%1, %c0_i32_47, %c0_i32_48] : memref<2x4x384xf32, #tpu.memory_space<vmem>> -> memref<1x4x128xf32, #tpu.memory_space<vmem>>
        %119 = tpu.memref_squeeze %118 : memref<1x4x128xf32, #tpu.memory_space<vmem>> -> memref<4x128xf32, #tpu.memory_space<vmem>>
        %120 = tpu.memref_slice %arg7[%c1_i32_45, %1] : memref<3x2x!tpu.dma_semaphore, #tpu.memory_space<semaphore_mem>> -> memref<1x1x!tpu.dma_semaphore, #tpu.memory_space<semaphore_mem>>
        %121 = tpu.memref_squeeze %120 : memref<1x1x!tpu.dma_semaphore, #tpu.memory_space<semaphore_mem>> -> memref<!tpu.dma_semaphore, #tpu.memory_space<semaphore_mem>>
        tpu.enqueue_dma source(%117 : memref<4x128xf32, #tpu.memory_space<any>>) target(%119 : memref<4x128xf32, #tpu.memory_space<vmem>>) target_semaphore(%121 : memref<!tpu.dma_semaphore, #tpu.memory_space<semaphore_mem>>)
      } else {
      }
      %c1_i32_42 = arith.constant 1 : i32
      %111 = arith.cmpi slt, %99, %c1_i32_42 : i32
      %112 = arith.extui %111 : i1 to i32
      %c0_i32_43 = arith.constant 0 : i32
      %113 = arith.cmpi ne, %112, %c0_i32_43 : i32
      scf.if %113 {
        %c128_i32_44 = arith.constant 128 : i32
        %114 = arith.addi %101, %c128_i32_44 : i32
        %115 = tpu.assume_multiple %114, 128 : i32
        %c2_i32_45 = arith.constant 2 : i32
        %c0_i32_46 = arith.constant 0 : i32
        %116 = tpu.memref_slice %arg2[%arg0, %c0_i32_46, %115] : memref<2x4x256xf32, #tpu.memory_space<any>> -> memref<1x4x128xf32, #tpu.memory_space<any>>
        %117 = tpu.memref_squeeze %116 : memref<1x4x128xf32, #tpu.memory_space<any>> -> memref<4x128xf32, #tpu.memory_space<any>>
        %c0_i32_47 = arith.constant 0 : i32
        %c256_i32_48 = arith.constant 256 : i32
        %118 = tpu.memref_slice %arg6[%1, %c0_i32_47, %c256_i32_48] : memref<2x4x384xf32, #tpu.memory_space<vmem>> -> memref<1x4x128xf32, #tpu.memory_space<vmem>>
        %119 = tpu.memref_squeeze %118 : memref<1x4x128xf32, #tpu.memory_space<vmem>> -> memref<4x128xf32, #tpu.memory_space<vmem>>
        %120 = tpu.memref_slice %arg7[%c2_i32_45, %1] : memref<3x2x!tpu.dma_semaphore, #tpu.memory_space<semaphore_mem>> -> memref<1x1x!tpu.dma_semaphore, #tpu.memory_space<semaphore_mem>>
        %121 = tpu.memref_squeeze %120 : memref<1x1x!tpu.dma_semaphore, #tpu.memory_space<semaphore_mem>> -> memref<!tpu.dma_semaphore, #tpu.memory_space<semaphore_mem>>
        tpu.enqueue_dma source(%117 : memref<4x128xf32, #tpu.memory_space<any>>) target(%119 : memref<4x128xf32, #tpu.memory_space<vmem>>) target_semaphore(%121 : memref<!tpu.dma_semaphore, #tpu.memory_space<semaphore_mem>>)
      } else {
      }
    } else {
    }
    %c0_i32_4 = arith.constant 0 : i32
    %c0_i32_5 = arith.constant 0 : i32
    %c0_i32_6 = arith.constant 0 : i32
    %9 = tpu.memref_slice %arg2[%arg0, %c0_i32_5, %c0_i32_6] : memref<2x4x256xf32, #tpu.memory_space<any>> -> memref<1x4x128xf32, #tpu.memory_space<any>>
    %10 = tpu.memref_squeeze %9 : memref<1x4x128xf32, #tpu.memory_space<any>> -> memref<4x128xf32, #tpu.memory_space<any>>
    %c0_i32_7 = arith.constant 0 : i32
    %c128_i32 = arith.constant 128 : i32
    %11 = tpu.memref_slice %arg6[%0, %c0_i32_7, %c128_i32] : memref<2x4x384xf32, #tpu.memory_space<vmem>> -> memref<1x4x128xf32, #tpu.memory_space<vmem>>
    %12 = tpu.memref_squeeze %11 : memref<1x4x128xf32, #tpu.memory_space<vmem>> -> memref<4x128xf32, #tpu.memory_space<vmem>>
    %13 = tpu.memref_slice %arg7[%c0_i32_4, %0] : memref<3x2x!tpu.dma_semaphore, #tpu.memory_space<semaphore_mem>> -> memref<1x1x!tpu.dma_semaphore, #tpu.memory_space<semaphore_mem>>
    %14 = tpu.memref_squeeze %13 : memref<1x1x!tpu.dma_semaphore, #tpu.memory_space<semaphore_mem>> -> memref<!tpu.dma_semaphore, #tpu.memory_space<semaphore_mem>>
    tpu.wait_dma2 semaphore(%14 : memref<!tpu.dma_semaphore, #tpu.memory_space<semaphore_mem>>) src(%10 : memref<4x128xf32, #tpu.memory_space<any>>) dst(%12 : memref<4x128xf32, #tpu.memory_space<vmem>>)
    %c0_i32_8 = arith.constant 0 : i32
    %15 = arith.cmpi sgt, %arg1, %c0_i32_8 : i32
    %16 = arith.extui %15 : i1 to i32
    %c0_i32_9 = arith.constant 0 : i32
    %17 = arith.cmpi ne, %16, %c0_i32_9 : i32
    scf.if %17 {
      %c1_i32_34 = arith.constant 1 : i32
      %c0_i32_35 = arith.constant 0 : i32
      %c0_i32_36 = arith.constant 0 : i32
      %99 = tpu.memref_slice %arg2[%arg0, %c0_i32_35, %c0_i32_36] : memref<2x4x256xf32, #tpu.memory_space<any>> -> memref<1x4x128xf32, #tpu.memory_space<any>>
      %100 = tpu.memref_squeeze %99 : memref<1x4x128xf32, #tpu.memory_space<any>> -> memref<4x128xf32, #tpu.memory_space<any>>
      %c0_i32_37 = arith.constant 0 : i32
      %c0_i32_38 = arith.constant 0 : i32
      %101 = tpu.memref_slice %arg6[%0, %c0_i32_37, %c0_i32_38] : memref<2x4x384xf32, #tpu.memory_space<vmem>> -> memref<1x4x128xf32, #tpu.memory_space<vmem>>
      %102 = tpu.memref_squeeze %101 : memref<1x4x128xf32, #tpu.memory_space<vmem>> -> memref<4x128xf32, #tpu.memory_space<vmem>>
      %103 = tpu.memref_slice %arg7[%c1_i32_34, %0] : memref<3x2x!tpu.dma_semaphore, #tpu.memory_space<semaphore_mem>> -> memref<1x1x!tpu.dma_semaphore, #tpu.memory_space<semaphore_mem>>
      %104 = tpu.memref_squeeze %103 : memref<1x1x!tpu.dma_semaphore, #tpu.memory_space<semaphore_mem>> -> memref<!tpu.dma_semaphore, #tpu.memory_space<semaphore_mem>>
      tpu.wait_dma2 semaphore(%104 : memref<!tpu.dma_semaphore, #tpu.memory_space<semaphore_mem>>) src(%100 : memref<4x128xf32, #tpu.memory_space<any>>) dst(%102 : memref<4x128xf32, #tpu.memory_space<vmem>>)
    } else {
    }
    %c1_i32_10 = arith.constant 1 : i32
    %18 = arith.cmpi slt, %arg1, %c1_i32_10 : i32
    %19 = arith.extui %18 : i1 to i32
    %c0_i32_11 = arith.constant 0 : i32
    %20 = arith.cmpi ne, %19, %c0_i32_11 : i32
    scf.if %20 {
      %c2_i32_34 = arith.constant 2 : i32
      %c0_i32_35 = arith.constant 0 : i32
      %c0_i32_36 = arith.constant 0 : i32
      %99 = tpu.memref_slice %arg2[%arg0, %c0_i32_35, %c0_i32_36] : memref<2x4x256xf32, #tpu.memory_space<any>> -> memref<1x4x128xf32, #tpu.memory_space<any>>
      %100 = tpu.memref_squeeze %99 : memref<1x4x128xf32, #tpu.memory_space<any>> -> memref<4x128xf32, #tpu.memory_space<any>>
      %c0_i32_37 = arith.constant 0 : i32
      %c256_i32_38 = arith.constant 256 : i32
      %101 = tpu.memref_slice %arg6[%0, %c0_i32_37, %c256_i32_38] : memref<2x4x384xf32, #tpu.memory_space<vmem>> -> memref<1x4x128xf32, #tpu.memory_space<vmem>>
      %102 = tpu.memref_squeeze %101 : memref<1x4x128xf32, #tpu.memory_space<vmem>> -> memref<4x128xf32, #tpu.memory_space<vmem>>
      %103 = tpu.memref_slice %arg7[%c2_i32_34, %0] : memref<3x2x!tpu.dma_semaphore, #tpu.memory_space<semaphore_mem>> -> memref<1x1x!tpu.dma_semaphore, #tpu.memory_space<semaphore_mem>>
      %104 = tpu.memref_squeeze %103 : memref<1x1x!tpu.dma_semaphore, #tpu.memory_space<semaphore_mem>> -> memref<!tpu.dma_semaphore, #tpu.memory_space<semaphore_mem>>
      tpu.wait_dma2 semaphore(%104 : memref<!tpu.dma_semaphore, #tpu.memory_space<semaphore_mem>>) src(%100 : memref<4x128xf32, #tpu.memory_space<any>>) dst(%102 : memref<4x128xf32, #tpu.memory_space<vmem>>)
    } else {
    }
    %c128_i32_12 = arith.constant 128 : i32
    %21 = arith.muli %arg1, %c128_i32_12 : i32
    %22 = tpu.assume_multiple %21, 128 : i32
    %23 = arith.index_cast %0 : i32 to index
    %c0 = arith.constant 0 : index
    %c0_13 = arith.constant 0 : index
    %24 = vector.load %arg6[%23, %c0, %c0_13] : memref<2x4x384xf32, #tpu.memory_space<vmem>>, vector<1x4x384xf32>
    %25 = vector.shape_cast %24 : vector<1x4x384xf32> to vector<4x384xf32>
    %26 = vector.extract_strided_slice %25 {offsets = [0, 111], sizes = [4, 162], strides = [1, 1]} : vector<4x384xf32> to vector<4x162xf32>
    %27 = tpu.iota {dimensions = array<i32: 1>} : vector<1x162xi32>
    %c17_i32 = arith.constant 17 : i32
    %28 = arith.subi %22, %c17_i32 : i32
    %29 = vector.broadcast %28 : i32 to vector<1x162xi32>
    %30 = arith.addi %27, %29 : vector<1x162xi32>
    %c0_i32_14 = arith.constant 0 : i32
    %31 = vector.broadcast %c0_i32_14 : i32 to vector<1x162xi32>
    %32 = arith.cmpi sge, %30, %31 : vector<1x162xi32>
    %c256_i32 = arith.constant 256 : i32
    %33 = vector.broadcast %c256_i32 : i32 to vector<1x162xi32>
    %34 = arith.cmpi slt, %30, %33 : vector<1x162xi32>
    %35 = arith.andi %32, %34 : vector<1x162xi1>
    %cst = arith.constant 0.000000e+00 : f32
    %36 = vector.shape_cast %35 : vector<1x162xi1> to vector<1x162xi1>
    %37 = vector.broadcast %36 : vector<1x162xi1> to vector<4x162xi1>
    %38 = vector.broadcast %cst : f32 to vector<4x162xf32>
    %39 = arith.select %37, %26, %38 : vector<4x162xi1>, vector<4x162xf32>
    %40 = vector.extract_strided_slice %39 {offsets = [0, 0], sizes = [4, 160], strides = [1, 1]} : vector<4x162xf32> to vector<4x160xf32>
    %41 = vector.extract_strided_slice %39 {offsets = [0, 1], sizes = [4, 160], strides = [1, 1]} : vector<4x162xf32> to vector<4x160xf32>
    %42 = vector.extract_strided_slice %39 {offsets = [0, 2], sizes = [4, 160], strides = [1, 1]} : vector<4x162xf32> to vector<4x160xf32>
    %43 = vector.extract_strided_slice %30 {offsets = [0, 1], sizes = [1, 160], strides = [1, 1]} : vector<1x162xi32> to vector<1x160xi32>
    %c16_i32 = arith.constant 16 : i32
    %44 = vector.broadcast %c16_i32 : i32 to vector<1x160xi32>
    %45 = arith.addi %43, %44 : vector<1x160xi32>
    %c16_i32_15 = arith.constant 16 : i32
    %c0_i32_16 = arith.constant 0 : i32
    %46 = arith.cmpi eq, %c16_i32_15, %c0_i32_16 : i32
    %c1_i32_17 = arith.constant 1 : i32
    %47 = arith.select %46, %c1_i32_17, %c16_i32_15 : i32
    %48 = vector.broadcast %47 : i32 to vector<1x160xi32>
    %49 = arith.remsi %45, %48 : vector<1x160xi32>
    %c0_i32_18 = arith.constant 0 : i32
    %50 = vector.broadcast %c0_i32_18 : i32 to vector<1x160xi32>
    %51 = arith.cmpi ne, %49, %50 : vector<1x160xi32>
    %c0_i32_19 = arith.constant 0 : i32
    %52 = vector.broadcast %c0_i32_19 : i32 to vector<1x160xi32>
    %53 = arith.cmpi slt, %49, %52 : vector<1x160xi32>
    %c0_i32_20 = arith.constant 0 : i32
    %54 = arith.cmpi slt, %47, %c0_i32_20 : i32
    %55 = vector.broadcast %54 : i1 to vector<1x160xi1>
    %56 = vector.broadcast %55 : vector<1x160xi1> to vector<1x160xi1>
    %57 = arith.xori %53, %56 : vector<1x160xi1>
    %58 = arith.andi %57, %51 : vector<1x160xi1>
    %59 = vector.broadcast %47 : i32 to vector<1x160xi32>
    %60 = arith.addi %49, %59 : vector<1x160xi32>
    %61 = arith.select %58, %60, %49 : vector<1x160xi1>, vector<1x160xi32>
    %c0_i32_21 = arith.constant 0 : i32
    %62 = vector.broadcast %c0_i32_21 : i32 to vector<1x160xi32>
    %63 = arith.cmpi ne, %61, %62 : vector<1x160xi32>
    %cst_22 = arith.constant 0.000000e+00 : f32
    %64 = vector.shape_cast %63 : vector<1x160xi1> to vector<1x160xi1>
    %65 = vector.broadcast %64 : vector<1x160xi1> to vector<4x160xi1>
    %66 = vector.broadcast %cst_22 : f32 to vector<4x160xf32>
    %67 = arith.select %65, %40, %66 : vector<4x160xi1>, vector<4x160xf32>
    %68 = arith.addf %41, %67 : vector<4x160xf32>
    %c15_i32 = arith.constant 15 : i32
    %69 = vector.broadcast %c15_i32 : i32 to vector<1x160xi32>
    %70 = arith.cmpi ne, %61, %69 : vector<1x160xi32>
    %cst_23 = arith.constant 0.000000e+00 : f32
    %71 = vector.shape_cast %70 : vector<1x160xi1> to vector<1x160xi1>
    %72 = vector.broadcast %71 : vector<1x160xi1> to vector<4x160xi1>
    %73 = vector.broadcast %cst_23 : f32 to vector<4x160xf32>
    %74 = arith.select %72, %42, %73 : vector<4x160xi1>, vector<4x160xf32>
    %75 = arith.addf %68, %74 : vector<4x160xf32>
    %76 = vector.extract_strided_slice %75 {offsets = [0, 0], sizes = [4, 128], strides = [1, 1]} : vector<4x160xf32> to vector<4x128xf32>
    %77 = vector.extract_strided_slice %75 {offsets = [0, 16], sizes = [4, 128], strides = [1, 1]} : vector<4x160xf32> to vector<4x128xf32>
    %78 = arith.addf %76, %77 : vector<4x128xf32>
    %79 = vector.extract_strided_slice %75 {offsets = [0, 32], sizes = [4, 128], strides = [1, 1]} : vector<4x160xf32> to vector<4x128xf32>
    %80 = arith.addf %78, %79 : vector<4x128xf32>
    %cst_24 = arith.constant 0.111111112 : f32
    %81 = vector.broadcast %cst_24 : f32 to vector<4x128xf32>
    %82 = arith.mulf %80, %81 : vector<4x128xf32>
    %83 = vector.extract_strided_slice %25 {offsets = [0, 128], sizes = [4, 128], strides = [1, 1]} : vector<4x384xf32> to vector<4x128xf32>
    %84 = arith.subf %83, %82 : vector<4x128xf32>
    %c0_25 = arith.constant 0 : index
    %c0_26 = arith.constant 0 : index
    %85 = vector.load %arg3[%c0_25, %c0_26] : memref<4x4xf32, #tpu.memory_space<vmem>>, vector<4x4xf32>
    %cst_27 = arith.constant dense<0.000000e+00> : vector<4x128xf32>
    %86 = tpu.matmul %85, %84, %cst_27 {dimension_numbers = #tpu.dot_dimension_numbers<[1], [0], [0], [1], [0, 0, 1, 1], [], []>} : vector<4x4xf32>, vector<4x128xf32>, vector<4x128xf32> -> vector<4x128xf32>
    %c0_28 = arith.constant 0 : index
    %c0_29 = arith.constant 0 : index
    %87 = vector.load %arg4[%c0_28, %c0_29] : memref<4x1xf32, #tpu.memory_space<vmem>>, vector<4x1xf32>
    %88 = vector.broadcast %87 : vector<4x1xf32> to vector<4x128xf32>
    %89 = arith.addf %86, %88 : vector<4x128xf32>
    %90 = arith.negf %89 : vector<4x128xf32>
    %91 = math.exp %90 : vector<4x128xf32>
    %cst_30 = arith.constant 1.000000e+00 : f32
    %92 = vector.broadcast %cst_30 : f32 to vector<4x128xf32>
    %93 = arith.addf %92, %91 : vector<4x128xf32>
    %94 = arith.divf %92, %93 : vector<4x128xf32>
    %95 = arith.addf %83, %94 : vector<4x128xf32>
    %c0_31 = arith.constant 0 : index
    %c0_32 = arith.constant 0 : index
    %c0_33 = arith.constant 0 : index
    %96 = vector.load %arg5[%c0_31, %c0_32, %c0_33] : memref<1x4x128xf32, #tpu.memory_space<vmem>>, vector<1x4x128xf32>
    %97 = vector.shape_cast %96 : vector<1x4x128xf32> to vector<4x128xf32>
    %98 = vector.shape_cast %95 : vector<4x128xf32> to vector<1x4x128xf32>
    tpu.vector_store %arg5[%c0_31, %c0_32, %c0_33], %98 {strides = array<i32>} : memref<1x4x128xf32, #tpu.memory_space<vmem>>, vector<1x4x128xf32>,
    return
  }
  func.func @transform_1(%arg0: i32, %arg1: i32) -> (i32, i32) {
    %c0_i32 = arith.constant 0 : i32
    %c0_i32_0 = arith.constant 0 : i32
    %c0_i32_1 = arith.constant 0 : i32
    return %c0_i32, %c0_i32_0 : i32, i32
  }
  func.func @transform_2(%arg0: i32, %arg1: i32) -> (i32, i32) {
    %c0_i32 = arith.constant 0 : i32
    %c0_i32_0 = arith.constant 0 : i32
    %c0_i32_1 = arith.constant 0 : i32
    return %c0_i32, %c0_i32_0 : i32, i32
  }
  func.func @transform_3(%arg0: i32, %arg1: i32) -> (i32, i32, i32) {
    %c0_i32 = arith.constant 0 : i32
    %c0_i32_0 = arith.constant 0 : i32
    return %arg0, %c0_i32, %arg1 : i32, i32, i32
  }
}

</mosaic_0001>

<llo_original>
// kernel: tpu_custom_call.1
$region0: #{tpu_custom_call.1}
  #allocation0 [shape = 'u32[]', space=smem, size = 0x4, offset = 0x4, fixed_abs, tag = 'smem constant byte address 0x4 - core index']
  #allocation1 [shape = 'u32[144,128]{1,0:T(1,128)}', space=vmem, size = 0x12000, scoped, tag = 'internal scratch']
  #allocation2 [shape = 'f32[2,4,384]{2,1,0:T(4,128)}', space=vmem, size = 0x3000, scoped, tag = 'scratch operand']
  #allocation3 [shape = 's32[6]{0}', space=sflag, size = 0x18, scoped, tag = 'scratch operand']
  #allocation6 [shape = 's32[]', space=sflag, size = 0x4, offset = 0, fixed_abs, tag = 'sflag constant byte address 0x0 - dummy sync flag']
  #allocation7 [shape = 's32[]', space=sflag, size = 0x4, offset = 0, fixed_abs, tag = 'sflag constant byte address 0x0 - dummy sync flag']
  #allocation8 [shape = 'u32[]', space=smem, size = 0x4, offset = 0x44, fixed_abs, tag = 'smem constant byte address 0x44 - assertion arg 0']
  #allocation9 [shape = 'u32[]', space=smem, size = 0x4, offset = 0x48, fixed_abs, tag = 'smem constant byte address 0x48 - assertion arg 1']
  #allocation10 [shape = 's32[]', space=sflag, size = 0x4, offset = 0, fixed_abs, tag = 'sflag constant byte address 0x0 - dummy sync flag']
  #allocation11 [shape = 's32[]', space=sflag, size = 0x4, offset = 0, fixed_abs, tag = 'sflag constant byte address 0x0 - dummy sync flag']
  #allocation12 [shape = 's32[]', space=sflag, size = 0x4, offset = 0, fixed_abs, tag = 'sflag constant byte address 0x0 - dummy sync flag']
  #allocation13 [shape = 's32[]', space=sflag, size = 0x4, offset = 0, fixed_abs, tag = 'sflag constant byte address 0x0 - dummy sync flag']
  #allocation14 [shape = 's32[]', space=sflag, size = 0x4, offset = 0, fixed_abs, tag = 'sflag constant byte address 0x0 - dummy sync flag']
  #allocation15 [shape = 's32[]', space=sflag, size = 0x4, offset = 0, fixed_abs, tag = 'sflag constant byte address 0x0 - dummy sync flag']
  #allocation16 [shape = 's32[]', space=sflag, size = 0x4, offset = 0, fixed_abs, tag = 'sflag constant byte address 0x0 - dummy sync flag']
  #allocation17 [shape = 's32[]', space=sflag, size = 0x4, offset = 0, fixed_abs, tag = 'sflag constant byte address 0x0 - dummy sync flag']
  #allocation18 [shape = 's32[]', space=sflag, size = 0x4, offset = 0, fixed_abs, tag = 'sflag constant byte address 0x0 - dummy sync flag']
  #allocation19 [shape = 's32[]', space=sflag, size = 0x4, offset = 0, fixed_abs, tag = 'sflag constant byte address 0x0 - dummy sync flag']
  %s0 = inlined_call_operand.hbm [shape: f32[2,4,256], index: 0, kind: input, shape index: {}]
  %s1 = inlined_call_operand.vmem [shape: f32[4,4], index: 1, kind: input, shape index: {}]
  %s2 = inlined_call_operand.vmem [shape: f32[4,1], index: 2, kind: input, shape index: {}]
  %s3 = inlined_call_operand.hbm [shape: f32[2,4,256], index: 3, kind: output, shape index: {}]
  %s4 = sld [smem:[#allocation0]]
  $region97: #{tpu_custom_call.1} parent=0
    _
  %s6 = ssub.s32 1, %s4
  %s7 = scalar_select 0, %s6, %s4
  $region1: #{tpu_custom_call.1} parent=0
    #allocation4 [shape = 'u8[4096]{0}', space=vmem, size = 0x1000, scoped, tag = 'output window, operand 0']
    #allocation5 [shape = 's32[2]{0}', space=sflag, size = 0x8, scoped, tag = 'scoped memory for tpu_custom_call.1']
    %8 = vsyncpa [#allocation5], 0
    %s9 = scalar_lea.sflag [#allocation5], 1
    %10 = vsyncpa %s9, 0
    loop: start=0, step=1, limit=6
    $region2: #{tpu_custom_call.1} parent=1 // loop_pre_header
      _
    $region3: #{tpu_custom_call.1} parent=1 // loop_header
      %s12 = sphi 0, %s16
      %p13 = scmp.ge.s32.totalorder %s12, 6
      %s19 = sphi 0, %s31
      %s20 = sphi 0, %s27
      %s21 = sphi 0, %s19
      %s22 = sphi 0, %s20
      %s23 = sphi 0, %s21
      %s24 = sphi 0, %s22
      %s32 = sphi 0, %s32
      %s34 = sphi 0, %s32
      %s35 = sphi 0, %s34
      %s49 = sphi 0, %s35
      %s53 = sphi 0, %s53
      %s55 = sphi 0, %s53
      %s56 = sphi 0, %s55
      %s70 = sphi 0, %s56
      %s78 = sphi 0, %s80
      %s81 = sphi 0, %s78
      %s82 = sphi 0, %s81
      %s98 = sphi 0, %s82
    $region4: #{tpu_custom_call.1} parent=1 // loop_header_branch
      %15 = sbr.rel (%p13) target = $region8
    $region5: #{tpu_custom_call.1} parent=1 // loop_body
      %s17 = ssub.s32 %s12, 1
      %s18 = ssub.s32 %s12, 2
      %s25 = sadd.s32 1, %s20
      %p26 = scmp.ge.s32.totalorder %s25, 2
      %s27 = scalar_select %p26, 0, %s25
      %s28 = sadd.s32 1, %s19
      %s29 = scalar_select %p26, %s28, %s19
      %p30 = scmp.ge.s32.totalorder %s29, 2
      %s31 = scalar_select %p30, 0, %s29
      %s33 = sadd.s32 %s32, 1
      %p36 = scmp.eq.s32.totalorder %s12, 3
      %p37 = scmp.ne.s32.totalorder %s32, %s34
      %p38 = scmp.eq.s32.totalorder %s12, 0
      %p39 = por %p37, %p38
      %p40 = scmp.ne.s32.totalorder %s32, %s34
      %p41 = scmp.eq.s32.totalorder %s17, 3
      %p42 = por %p40, %p41
      %p43 = scmp.ne.s32.totalorder %s34, %s35
      %p44 = scmp.eq.s32.totalorder %s17, 0
      %p45 = por %p43, %p44
      %p46 = scmp.ne.s32.totalorder %s34, %s35
      %p47 = scmp.eq.s32.totalorder %s18, 3
      %p48 = por %p46, %p47
      %p50 = scmp.ne.s32.totalorder %s35, %s49
      %p51 = scmp.eq.s32.totalorder %s18, 0
      %p52 = por %p50, %p51
      %s54 = sadd.s32 %s53, 1
      %p57 = scmp.eq.s32.totalorder %s12, 3
      %p58 = scmp.ne.s32.totalorder %s53, %s55
      %p59 = scmp.eq.s32.totalorder %s12, 0
      %p60 = por %p58, %p59
      %p61 = scmp.ne.s32.totalorder %s53, %s55
      %p62 = scmp.eq.s32.totalorder %s17, 3
      %p63 = por %p61, %p62
      %p64 = scmp.ne.s32.totalorder %s55, %s56
      %p65 = scmp.eq.s32.totalorder %s17, 0
      %p66 = por %p64, %p65
      %p67 = scmp.ne.s32.totalorder %s55, %s56
      %p68 = scmp.eq.s32.totalorder %s18, 3
      %p69 = por %p67, %p68
      %p71 = scmp.ne.s32.totalorder %s56, %s70
      %p72 = scmp.eq.s32.totalorder %s18, 0
      %p73 = por %p71, %p72
      %s74 = ssub.s32 %s19, %s31
      %s75 = ssub.s32 %s20, %s27
      %s76 = sor.u32 %s74, %s75
      %p77 = scmp.eq.s32.totalorder %s76, 0
      %s79 = sadd.s32 %s78, 1
      %s80 = scalar_select %p77, %s78, %s79
      %p83 = pneg %p77
      %p84 = scmp.eq.s32.totalorder %s12, 3
      %p85 = por %p83, %p84
      %p86 = scmp.ne.s32.totalorder %s78, %s81
      %p87 = scmp.eq.s32.totalorder %s12, 0
      %p88 = por %p86, %p87
      %p89 = scmp.ne.s32.totalorder %s78, %s81
      %p90 = scmp.eq.s32.totalorder %s17, 3
      %p91 = por %p89, %p90
      %p92 = scmp.ne.s32.totalorder %s81, %s82
      %p93 = scmp.eq.s32.totalorder %s17, 0
      %p94 = por %p92, %p93
      %p95 = scmp.ne.s32.totalorder %s81, %s82
      %p96 = scmp.eq.s32.totalorder %s18, 3
      %p97 = por %p95, %p96
      %p99 = scmp.ne.s32.totalorder %s82, %s98
      %p100 = scmp.eq.s32.totalorder %s18, 0
      %p101 = por %p99, %p100
      %p102 = scmp.le.s32.totalorder 1, %s12
      %p103 = scmp.lt.s32.totalorder %s12, 5
      %p104 = pnand %p102, %p103
      %p105 = pneg %p104
      // Predicated region
      $region9: #{tpu_custom_call.1} parent=5 // pred_check
        _
      $region10: #{tpu_custom_call.1} parent=5 // pred_check_branch
        %107 = sbr.rel (%p104) target = $region12
      $region11: #{tpu_custom_call.1} parent=5 // pred_region
        %s108 = ssub.s32 %s12, 1
        // Predicated region
        $region13: #{tpu_custom_call.1} parent=11 // pred_check
          %p109 = pneg %p45
        $region14: #{tpu_custom_call.1} parent=11 // pred_check_branch
          %111 = sbr.rel (%p109) target = $region16
        $region15: #{tpu_custom_call.1} parent=11 // pred_region
          _
        $region16: #{tpu_custom_call.1} parent=11 // pred_fallthru
          _
        // Predicated region
        $region17: #{tpu_custom_call.1} parent=11 // pred_check
          %p112 = pneg %p66
        $region18: #{tpu_custom_call.1} parent=11 // pred_check_branch
          %114 = sbr.rel (%p112) target = $region20
        $region19: #{tpu_custom_call.1} parent=11 // pred_region
          _
        $region20: #{tpu_custom_call.1} parent=11 // pred_fallthru
          _
      $region12: #{tpu_custom_call.1} parent=5 // pred_fallthru
        _
      %p115 = scmp.lt.s32.totalorder %s12, 4
      // Predicated region
      $region21: #{tpu_custom_call.1} parent=5 // pred_check
        %p116 = pneg %p115
      $region22: #{tpu_custom_call.1} parent=5 // pred_check_branch
        %118 = sbr.rel (%p116) target = $region24
      $region23: #{tpu_custom_call.1} parent=5 // pred_region
        _
      $region24: #{tpu_custom_call.1} parent=5 // pred_fallthru
        _
      %p119 = scmp.le.s32.totalorder 1, %s12
      %p120 = scmp.lt.s32.totalorder %s12, 5
      %p121 = pnand %p119, %p120
      %p122 = pneg %p121
      // Predicated region
      $region25: #{tpu_custom_call.1} parent=5 // pred_check
        _
      $region26: #{tpu_custom_call.1} parent=5 // pred_check_branch
        %124 = sbr.rel (%p121) target = $region28
      $region27: #{tpu_custom_call.1} parent=5 // pred_region
        %s125 = ssub.s32 %s12, 1
        %p126 = pneg %p45
        %p127 = pneg %p42
        %p128 = pneg %p66
        %p129 = pneg %p63
        %p130 = pneg %p94
        %p131 = pneg %p91
        %s132 = sand.u32 %s81, 1
        %s133 = scalar_lea.sflag [#allocation5], %s132
        %s134 = sand.u32 %s81, 1
        %s135 = smul.addr %s134, 4
        %s136 = scalar_lea.vmem [#allocation4], %s135
        %s137 = sand.u32 %s22, 1
        %s138 = ssub.s32 1, %s137
        %p139 = scmp.eq.s32.totalorder %s22, 0
        // Predicated region
        $region29: #{tpu_custom_call.1} parent=27 // pred_check
          %p140 = pneg %p139
        $region30: #{tpu_custom_call.1} parent=27 // pred_check_branch
          %142 = sbr.rel (%p140) target = $region32
        $region31: #{tpu_custom_call.1} parent=27 // pred_region
          %s143 = smul.u32 %s22, 128
          %s144 = sshra.s32 %s143, 7
          %s145 = sand.u32 %s143, 127
          %s146 = smul.u32 %s21, 2
          %s147 = sadd.s32 %s144, %s146
          %s148 = smul.addr %s147, 64
          %s149 = scalar_lea.hbm %s0, %s148
          %s150 = smul.u32 %s137, 3
          %s151 = sadd.s32 1, %s150
          %s152 = smul.addr %s151, 4
          %s153 = scalar_lea.vmem [#allocation2], %s152
          %s154 = scalar_lea.sflag [#allocation3], %s137
          // Predicated region
          $region33: #{tpu_custom_call.1} parent=31 // pred_check
            _
          $region34: #{tpu_custom_call.1} parent=31 // pred_check_branch
            %156 = sbr.rel target = $region36
          $region35: #{tpu_custom_call.1} parent=31 // pred_region
            %157 = sst [smem:[#allocation8]] [#allocation7]
            %158 = sst [smem:[#allocation9]] [#allocation6]
          $region36: #{tpu_custom_call.1} parent=31 // pred_fallthru
            _
          %160 = shalt.err (0)
          %s162 = sshll.u32 %s153, 4
          %s163 = int_to_ptr.vmem [resolvable:$true] %s162
          %165 = dma.hbm_to_vmem [thread:$0]  %s149, 64, %s163, %s154
          %p166 = scmp.gt.s32.totalorder %s22, 0
          // Predicated region
          $region37: #{tpu_custom_call.1} parent=31 // pred_check
            %p167 = pneg %p166
          $region38: #{tpu_custom_call.1} parent=31 // pred_check_branch
            %169 = sbr.rel (%p167) target = $region40
          $region39: #{tpu_custom_call.1} parent=31 // pred_region
            %s170 = ssub.s32 %s143, 128
            %s171 = sshra.s32 %s170, 7
            %s172 = sand.u32 %s170, 127
            %s173 = sadd.s32 %s171, %s146
            %s174 = smul.addr %s173, 64
            %s175 = scalar_lea.hbm %s0, %s174
            %s176 = smul.addr %s150, 4
            %s177 = scalar_lea.vmem [#allocation2], %s176
            %s178 = sadd.s32 %s137, 2
            %s179 = scalar_lea.sflag [#allocation3], %s178
            // Predicated region
            $region41: #{tpu_custom_call.1} parent=39 // pred_check
              _
            $region42: #{tpu_custom_call.1} parent=39 // pred_check_branch
              %181 = sbr.rel target = $region44
            $region43: #{tpu_custom_call.1} parent=39 // pred_region
              %182 = sst [smem:[#allocation8]] [#allocation11]
              %183 = sst [smem:[#allocation9]] [#allocation10]
            $region44: #{tpu_custom_call.1} parent=39 // pred_fallthru
              _
            %185 = shalt.err (0)
            %s187 = sshll.u32 %s177, 4
            %s188 = int_to_ptr.vmem [resolvable:$true] %s187
            %190 = dma.hbm_to_vmem [thread:$0]  %s175, 64, %s188, %s179
          $region40: #{tpu_custom_call.1} parent=31 // pred_fallthru
            _
          %p191 = scmp.lt.s32.totalorder %s22, 1
          // Predicated region
          $region45: #{tpu_custom_call.1} parent=31 // pred_check
            %p192 = pneg %p191
          $region46: #{tpu_custom_call.1} parent=31 // pred_check_branch
            %194 = sbr.rel (%p192) target = $region48
          $region47: #{tpu_custom_call.1} parent=31 // pred_region
            %s195 = sadd.s32 %s143, 128
            %s196 = sshra.s32 %s195, 7
            %s197 = sand.u32 %s195, 127
            %s198 = sadd.s32 %s196, %s146
            %s199 = smul.addr %s198, 64
            %s200 = scalar_lea.hbm %s0, %s199
            %s201 = sadd.s32 2, %s150
            %s202 = smul.addr %s201, 4
            %s203 = scalar_lea.vmem [#allocation2], %s202
            %s204 = sadd.s32 %s137, 4
            %s205 = scalar_lea.sflag [#allocation3], %s204
            // Predicated region
            $region49: #{tpu_custom_call.1} parent=47 // pred_check
              _
            $region50: #{tpu_custom_call.1} parent=47 // pred_check_branch
              %207 = sbr.rel target = $region52
            $region51: #{tpu_custom_call.1} parent=47 // pred_region
              %208 = sst [smem:[#allocation8]] [#allocation13]
              %209 = sst [smem:[#allocation9]] [#allocation12]
            $region52: #{tpu_custom_call.1} parent=47 // pred_fallthru
              _
            %211 = shalt.err (0)
            %s213 = sshll.u32 %s203, 4
            %s214 = int_to_ptr.vmem [resolvable:$true] %s213
            %216 = dma.hbm_to_vmem [thread:$0]  %s200, 64, %s214, %s205
          $region48: #{tpu_custom_call.1} parent=31 // pred_fallthru
            _
        $region32: #{tpu_custom_call.1} parent=27 // pred_fallthru
          _
        %s217 = sadd.s32 %s22, 1
        %p218 = scmp.lt.s32.totalorder %s217, 2
        // Predicated region
        $region53: #{tpu_custom_call.1} parent=27 // pred_check
          %p219 = pneg %p218
        $region54: #{tpu_custom_call.1} parent=27 // pred_check_branch
          %221 = sbr.rel (%p219) target = $region56
        $region55: #{tpu_custom_call.1} parent=27 // pred_region
          %s222 = smul.u32 %s217, 128
          %s223 = sshra.s32 %s222, 7
          %s224 = sand.u32 %s222, 127
          %s225 = smul.u32 %s21, 2
          %s226 = sadd.s32 %s223, %s225
          %s227 = smul.addr %s226, 64
          %s228 = scalar_lea.hbm %s0, %s227
          %s229 = smul.u32 %s138, 3
          %s230 = sadd.s32 1, %s229
          %s231 = smul.addr %s230, 4
          %s232 = scalar_lea.vmem [#allocation2], %s231
          %s233 = scalar_lea.sflag [#allocation3], %s138
          // Predicated region
          $region57: #{tpu_custom_call.1} parent=55 // pred_check
            _
          $region58: #{tpu_custom_call.1} parent=55 // pred_check_branch
            %235 = sbr.rel target = $region60
          $region59: #{tpu_custom_call.1} parent=55 // pred_region
            %236 = sst [smem:[#allocation8]] [#allocation15]
            %237 = sst [smem:[#allocation9]] [#allocation14]
          $region60: #{tpu_custom_call.1} parent=55 // pred_fallthru
            _
          %239 = shalt.err (0)
          %s241 = sshll.u32 %s232, 4
          %s242 = int_to_ptr.vmem [resolvable:$true] %s241
          %244 = dma.hbm_to_vmem [thread:$0]  %s228, 64, %s242, %s233
          %p245 = scmp.gt.s32.totalorder %s217, 0
          // Predicated region
          $region61: #{tpu_custom_call.1} parent=55 // pred_check
            %p246 = pneg %p245
          $region62: #{tpu_custom_call.1} parent=55 // pred_check_branch
            %248 = sbr.rel (%p246) target = $region64
          $region63: #{tpu_custom_call.1} parent=55 // pred_region
            %s249 = ssub.s32 %s222, 128
            %s250 = sshra.s32 %s249, 7
            %s251 = sand.u32 %s249, 127
            %s252 = sadd.s32 %s250, %s225
            %s253 = smul.addr %s252, 64
            %s254 = scalar_lea.hbm %s0, %s253
            %s255 = smul.addr %s229, 4
            %s256 = scalar_lea.vmem [#allocation2], %s255
            %s257 = sadd.s32 %s138, 2
            %s258 = scalar_lea.sflag [#allocation3], %s257
            // Predicated region
            $region65: #{tpu_custom_call.1} parent=63 // pred_check
              _
            $region66: #{tpu_custom_call.1} parent=63 // pred_check_branch
              %260 = sbr.rel target = $region68
            $region67: #{tpu_custom_call.1} parent=63 // pred_region
              %261 = sst [smem:[#allocation8]] [#allocation17]
              %262 = sst [smem:[#allocation9]] [#allocation16]
            $region68: #{tpu_custom_call.1} parent=63 // pred_fallthru
              _
            %264 = shalt.err (0)
            %s266 = sshll.u32 %s256, 4
            %s267 = int_to_ptr.vmem [resolvable:$true] %s266
            %269 = dma.hbm_to_vmem [thread:$0]  %s254, 64, %s267, %s258
          $region64: #{tpu_custom_call.1} parent=55 // pred_fallthru
            _
          %p270 = scmp.lt.s32.totalorder %s217, 1
          // Predicated region
          $region69: #{tpu_custom_call.1} parent=55 // pred_check
            %p271 = pneg %p270
          $region70: #{tpu_custom_call.1} parent=55 // pred_check_branch
            %273 = sbr.rel (%p271) target = $region72
          $region71: #{tpu_custom_call.1} parent=55 // pred_region
            %s274 = sadd.s32 %s222, 128
            %s275 = sshra.s32 %s274, 7
            %s276 = sand.u32 %s274, 127
            %s277 = sadd.s32 %s275, %s225
            %s278 = smul.addr %s277, 64
            %s279 = scalar_lea.hbm %s0, %s278
            %s280 = sadd.s32 2, %s229
            %s281 = smul.addr %s280, 4
            %s282 = scalar_lea.vmem [#allocation2], %s281
            %s283 = sadd.s32 %s138, 4
            %s284 = scalar_lea.sflag [#allocation3], %s283
            // Predicated region
            $region73: #{tpu_custom_call.1} parent=71 // pred_check
              _
            $region74: #{tpu_custom_call.1} parent=71 // pred_check_branch
              %286 = sbr.rel target = $region76
            $region75: #{tpu_custom_call.1} parent=71 // pred_region
              %287 = sst [smem:[#allocation8]] [#allocation19]
              %288 = sst [smem:[#allocation9]] [#allocation18]
            $region76: #{tpu_custom_call.1} parent=71 // pred_fallthru
              _
            %290 = shalt.err (0)
            %s292 = sshll.u32 %s282, 4
            %s293 = int_to_ptr.vmem [resolvable:$true] %s292
            %295 = dma.hbm_to_vmem [thread:$0]  %s279, 64, %s293, %s284
          $region72: #{tpu_custom_call.1} parent=55 // pred_fallthru
            _
        $region56: #{tpu_custom_call.1} parent=27 // pred_fallthru
          _
        %s296 = scalar_lea.sflag [#allocation3], %s137
        %s297 = smul.u32 4, 1
        %s298 = smul.u32 %s297, 1
        %s299 = sshll.u32 %s298, 4
        %300 = dma.done %s296, %s299
        %p301 = scmp.gt.s32.totalorder %s22, 0
        // Predicated region
        $region77: #{tpu_custom_call.1} parent=27 // pred_check
          %p302 = pneg %p301
        $region78: #{tpu_custom_call.1} parent=27 // pred_check_branch
          %304 = sbr.rel (%p302) target = $region80
        $region79: #{tpu_custom_call.1} parent=27 // pred_region
          %s305 = sadd.s32 %s137, 2
          %s306 = scalar_lea.sflag [#allocation3], %s305
          %s307 = sshll.u32 %s298, 4
          %308 = dma.done %s306, %s307
        $region80: #{tpu_custom_call.1} parent=27 // pred_fallthru
          _
        %p309 = scmp.lt.s32.totalorder %s22, 1
        // Predicated region
        $region81: #{tpu_custom_call.1} parent=27 // pred_check
          %p310 = pneg %p309
        $region82: #{tpu_custom_call.1} parent=27 // pred_check_branch
          %312 = sbr.rel (%p310) target = $region84
        $region83: #{tpu_custom_call.1} parent=27 // pred_region
          %s313 = sadd.s32 %s137, 4
          %s314 = scalar_lea.sflag [#allocation3], %s313
          %s315 = sshll.u32 %s298, 4
          %316 = dma.done %s314, %s315
        $region84: #{tpu_custom_call.1} parent=27 // pred_fallthru
          _
        %s317 = smul.u32 %s22, 128
        %s318 = smul.u32 %s137, 3
        %s319 = smul.addr %s318, 4
        %s320 = scalar_lea.vmem [#allocation2], %s319
        %v321 = vld [vmem:[%s320] sm:$0xff]
        %v322 = vld [vmem:[%s320 + $0x8] sm:$0xf]
        %v323 = vlaneseq
        %v324 = vand.u32 %v323, 127
        %v325 = vadd.s32 %v324, 128
        %s326 = ssub.s32 %s317, 17
        %v327 = vstv %s326
        %v328 = vadd.s32 %v324, %v327
        %v329 = vadd.s32 %v325, %v327
        %vm330 = vcmp.ge.s32.totalorder %v328, 0
        %vm331 = vcmp.ge.s32.totalorder %v329, 0
        %vm332 = vcmp.lt.s32.totalorder %v328, 256
        %vm333 = vcmp.lt.s32.totalorder %v329, 256
        %vm334 = vmand %vm330, %vm332
        %vm335 = vmand %vm331, %vm333
        %v336 = vsel %vm334, 1, 0
        %v337 = vsel %vm335, 1, 0
        %vm338 = vcmp.eq.s32.totalorder %v336, 1
        %vm339 = vcmp.eq.s32.totalorder %v337, 1
        %v342 = vcombine.high %v321, %v321
        %343 = vrot.lane.b32.xlu0 %v321, 17
        %v344 = vpop.permute.xlu0 %343
        %345 = vrot.lane.b32.xlu0 %v342, 17
        %v346 = vpop.permute.xlu0 %345
        %347 = vrot.lane.b32.xlu0 %v322, 17
        %v348 = vpop.permute.xlu0 %347
        %vm349 = vcmask 138240
        %v350 = vsel %vm349, %v344, %v346
        %v351 = vsel %vm349, %v346, %v348
        %v354 = vsel %vm338, %v350, 0.0
        %v355 = vsel %vm339, %v351, 0.0
        %v356 = vadd.s32 %v328, 16
        %v357 = vadd.s32 %v329, 16
        %vm358 = vcmp.lt.s32.totalorder %v356, 0
        %v359 = vsub.s32 0, %v356
        %v360 = vsel %vm358, %v359, %v356
        %v361 = vshrl.u32 %v360, 4
        %v362 = vand.u32 %v360, 15
        %v363 = vsub.s32 0, %v362
        %v364 = vsel %vm358, %v363, %v362
        %vm365 = vcmp.lt.s32.totalorder %v357, 0
        %v366 = vsub.s32 0, %v357
        %v367 = vsel %vm365, %v366, %v357
        %v368 = vshrl.u32 %v367, 4
        %v369 = vand.u32 %v367, 15
        %v370 = vsub.s32 0, %v369
        %v371 = vsel %vm365, %v370, %v369
        %vm372 = vcmp.ne.s32.totalorder %v364, 0
        %vm373 = vcmp.ne.s32.totalorder %v371, 0
        %vm374 = vcmp.lt.s32.totalorder %v364, 0
        %vm375 = vcmp.lt.s32.totalorder %v371, 0
        %vm376 = vmand %vm374, %vm372
        %vm377 = vmand %vm375, %vm373
        %v378 = vadd.s32 %v364, 16
        %v379 = vadd.s32 %v371, 16
        %v380 = vsel %vm376, %v378, %v364
        %v381 = vsel %vm377, %v379, %v371
        %vm382 = vcmp.ne.s32.totalorder %v380, 0
        %vm383 = vcmp.ne.s32.totalorder %v381, 0
        %v384 = vsel %vm382, 1, 0
        %v385 = vsel %vm383, 1, 0
        %vm386 = vcmp.eq.s32.totalorder %v384, 1
        %vm387 = vcmp.eq.s32.totalorder %v385, 1
        %390 = vrot.lane.b32.xlu0 %v354, 1
        %v391 = vpop.permute.xlu0 %390
        %392 = vrot.lane.b32.xlu0 %v355, 1
        %v393 = vpop.permute.xlu0 %392
        %vm394 = vcmask 7168
        %v395 = vsel %vm394, %v391, %v393
        %v398 = vsel %vm386, %v391, 0.0
        %v399 = vsel %vm387, %v395, 0.0
        %v400 = vadd.f32 %v354, %v398
        %v401 = vadd.f32 %v355, %v399
        %vm402 = vcmp.ne.s32.totalorder %v380, 15
        %vm403 = vcmp.ne.s32.totalorder %v381, 15
        %v404 = vsel %vm402, 1, 0
        %v405 = vsel %vm403, 1, 0
        %vm406 = vcmp.eq.s32.totalorder %v404, 1
        %vm407 = vcmp.eq.s32.totalorder %v405, 1
        %408 = vrot.lane.b32.xlu0 %v354, 127
        %v409 = vpop.permute.xlu0 %408
        %410 = vrot.lane.b32.xlu0 %v355, 127
        %v411 = vpop.permute.xlu0 %410
        %vm412 = vcmask 1039360
        %v413 = vsel %vm412, %v409, %v411
        %v416 = vsel %vm406, %v413, 0.0
        %v417 = vsel %vm407, %v411, 0.0
        %v418 = vadd.f32 %v400, %v416
        %v419 = vadd.f32 %v401, %v417
        %422 = vrot.lane.b32.xlu0 %v418, 112
        %v423 = vpop.permute.xlu0 %422
        %424 = vrot.lane.b32.xlu0 %v419, 112
        %v425 = vpop.permute.xlu0 %424
        %vm426 = vcmask 916480
        %v427 = vsel %vm426, %v423, %v425
        %v430 = vadd.f32 %v418, %v427
        %v431 = vadd.f32 %v419, %v425
        %432 = vrot.lane.b32.xlu0 %v418, 96
        %v433 = vpop.permute.xlu0 %432
        %434 = vrot.lane.b32.xlu0 %v419, 96
        %v435 = vpop.permute.xlu0 %434
        %vm436 = vcmask 785408
        %v437 = vsel %vm436, %v433, %v435
        %v440 = vadd.f32 %v430, %v437
        %v441 = vadd.f32 %v431, %v435
        %v442 = vmul.f32 %v440, 0.11111111
        %v443 = vmul.f32 %v441, 0.11111111
        %v444 = vrot.slane %v321, 4
        %v448 = vcombine.low %v442, %v443
        %449 = vrot.lane.b32.xlu0 %v448, 127
        %v450 = vpop.permute.xlu0 %449
        %v451 = vrot.slane %v450, 4
        %v452 = vsel %vm412, %v450, %v451
        %v454 = vsub.f32 %v444, %v452
        %v455 = vld [vmem:[%s1] sm:$0xf]
        %v456 = vld [vmem:[%s2] sm:$0xf]
        %458 = vset.pattern.permute.xlu0 0
        %459 = vperm.xlu0 %458, %v456
        %v460 = vpop.permute.xlu0 %459
        %vm462 = vcmask 31744
        %v464 = vsel %vm462, %v455, 0
        %vm466 = vcmask 1043456
        %v468 = vsel %vm466, %v454, 0
        %470 = vmatprep.subr.mxu0 0.0
        %471 = vmatpush1.msra.mxu0 %v468
        %472 = vmatprep.subr.mxu0 0.0
        %473 = vmatpush1.msra.mxu0 0.0
        %474 = vmatprep.subr.mxu0 0.0
        %475 = vmatpush1.msra.mxu0 0.0
        %476 = vmatprep.subr.mxu0 0.0
        %477 = vmatpush1.msra.mxu0 0.0
        %478 = vmatprep.subr.mxu0 0.0
        %479 = vmatpush1.msra.mxu0 0.0
        %480 = vmatprep.subr.mxu0 0.0
        %481 = vmatpush1.msra.mxu0 0.0
        %482 = vmatprep.subr.mxu0 0.0
        %483 = vmatpush1.msra.mxu0 0.0
        %484 = vmatprep.subr.mxu0 0.0
        %485 = vmatpush1.msra.mxu0 0.0
        %486 = vmatprep.subr.mxu0 0.0
        %487 = vmatpush1.msra.mxu0 0.0
        %488 = vmatprep.subr.mxu0 0.0
        %489 = vmatpush1.msra.mxu0 0.0
        %490 = vmatprep.subr.mxu0 0.0
        %491 = vmatpush1.msra.mxu0 0.0
        %492 = vmatprep.subr.mxu0 0.0
        %493 = vmatpush1.msra.mxu0 0.0
        %494 = vmatprep.subr.mxu0 0.0
        %495 = vmatpush1.msra.mxu0 0.0
        %496 = vmatprep.subr.mxu0 0.0
        %497 = vmatpush1.msra.mxu0 0.0
        %498 = vmatprep.subr.mxu0 0.0
        %499 = vmatpush1.msra.mxu0 0.0
        %500 = vmatprep.subr.mxu0 0.0
        %501 = vmatpush1.msra.mxu0 0.0
        %502 = vmatprep.subr.mxu0 0.0
        %503 = vmatpush1.msra.mxu0 0.0
        %504 = vmatprep.subr.mxu0 0.0
        %505 = vmatpush1.msra.mxu0 0.0
        %506 = vmatprep.subr.mxu0 0.0
        %507 = vmatpush1.msra.mxu0 0.0
        %508 = vmatprep.subr.mxu0 0.0
        %509 = vmatpush1.msra.mxu0 0.0
        %510 = vmatprep.subr.mxu0 0.0
        %511 = vmatpush1.msra.mxu0 0.0
        %512 = vmatprep.subr.mxu0 0.0
        %513 = vmatpush1.msra.mxu0 0.0
        %514 = vmatprep.subr.mxu0 0.0
        %515 = vmatpush1.msra.mxu0 0.0
        %516 = vmatprep.subr.mxu0 0.0
        %517 = vmatpush1.msra.mxu0 0.0
        %518 = vmatprep.subr.mxu0 0.0
        %519 = vmatpush1.msra.mxu0 0.0
        %520 = vmatprep.subr.mxu0 0.0
        %521 = vmatpush1.msra.mxu0 0.0
        %522 = vmatprep.subr.mxu0 0.0
        %523 = vmatpush1.msra.mxu0 0.0
        %524 = vmatprep.subr.mxu0 0.0
        %525 = vmatpush1.msra.mxu0 0.0
        %526 = vmatprep.subr.mxu0 0.0
        %527 = vmatpush1.msra.mxu0 0.0
        %528 = vmatprep.subr.mxu0 0.0
        %529 = vmatpush1.msra.mxu0 0.0
        %530 = vmatprep.subr.mxu0 0.0
        %531 = vmatpush1.msra.mxu0 0.0
        %532 = vmatprep.subr.mxu0 0.0
        %533 = vmatpush1.msra.mxu0 0.0
        %534 = vmatprep.mubr.f32.mxu0 0.0
        %535 = vmatmul.mubr.f32.gmra.mrb[0].mxu0 %v464
        %v536 = vpop.f32.mrb[0].mxu0
        %v537 = vadd.f32 %v460, %v536
        %v538 = vpop.f32.mrb[0].mxu0
        %539 = vdwg.mxu0
        %v540 = vxor.u32 %v537, 2147483648
        %v541 = vmul.f32 %v540, 1.442695
        %v542 = vpow.pop %v541
        %v543 = vadd.f32 %v542, 1.0
        %v544 = vrcp.pop %v543
        %v545 = vmul.f32 1.0, %v544
        %v546 = vadd.f32 %v444, %v545
        %547 = vst [vmem:[%s136] sm:$0xf] %v546
        %s548 = sand.u32 %s81, 1
        %s549 = scalar_lea.sflag [#allocation5], %s548
        %s550 = sand.u32 %s81, 1
        %s551 = smul.addr %s550, 4
        %s552 = scalar_lea.vmem [#allocation4], %s551
        // Predicated region
        $region85: #{tpu_custom_call.1} parent=27 // pred_check
          %p553 = pneg %p91
        $region86: #{tpu_custom_call.1} parent=27 // pred_check_branch
          %555 = sbr.rel (%p553) target = $region88
        $region87: #{tpu_custom_call.1} parent=27 // pred_region
          %s557 = ssub.s32 64, 64
          %558 = vsyncadd %s549, %s557
          %s559 = smul.addr %s21, 2
          %s560 = sadd.s32 %s22, %s559
          %s561 = smul.addr %s560, 64
          %s562 = scalar_lea.hbm %s3, %s561
          %s564 = sshll.u32 %s552, 4
          %s565 = int_to_ptr.vmem [resolvable:$true] %s564
          %567 = dma.vmem_to_hbm [thread:$0]  %s565, 64, %s562, %s549
        $region88: #{tpu_custom_call.1} parent=27 // pred_fallthru
          _
      $region28: #{tpu_custom_call.1} parent=5 // pred_fallthru
        _
      %p568 = scmp.le.s32.totalorder 2, %s12
      // Predicated region
      $region89: #{tpu_custom_call.1} parent=5 // pred_check
        %p569 = pneg %p568
      $region90: #{tpu_custom_call.1} parent=5 // pred_check_branch
        %571 = sbr.rel (%p569) target = $region92
      $region91: #{tpu_custom_call.1} parent=5 // pred_region
        %s572 = ssub.s32 %s12, 2
        // Predicated region
        $region93: #{tpu_custom_call.1} parent=91 // pred_check
          %p573 = pneg %p97
        $region94: #{tpu_custom_call.1} parent=91 // pred_check_branch
          %575 = sbr.rel (%p573) target = $region96
        $region95: #{tpu_custom_call.1} parent=91 // pred_region
          %s576 = sand.u32 %s82, 1
          %s577 = scalar_lea.sflag [#allocation5], %s576
          %s578 = sand.u32 %s82, 1
          %s579 = smul.addr %s578, 4
          %s580 = scalar_lea.vmem [#allocation4], %s579
          %581 = dma.done %s577, 64
        $region96: #{tpu_custom_call.1} parent=91 // pred_fallthru
          _
      $region92: #{tpu_custom_call.1} parent=5 // pred_fallthru
        _
    $region6: #{tpu_custom_call.1} parent=1 // loop_footer
      %s16 = sadd.s32 1, %s12
    $region7: #{tpu_custom_call.1} parent=1 // loop_footer_branch
      %11 = sbr.rel target = $region3
    $region8: #{tpu_custom_call.1} parent=1 // loop_exit
      _
    %582 = vsyncpa [#allocation5], 1
    %s583 = scalar_lea.sflag [#allocation5], 1
    %584 = vsyncpa %s583, 1
  %585 = vsyncmov [#allocation3]
  %s586 = vpop.sfrf %585
  %p587 = scmp.eq.s32.totalorder %s586, 0
  %p588 = pneg %p587
  %590 = shalt.err (%p588)
  %s591 = scalar_lea.sflag [#allocation3], 1
  %592 = vsyncmov %s591
  %s593 = vpop.sfrf %592
  %p594 = scmp.eq.s32.totalorder %s593, 0
  %p595 = pneg %p594
  %597 = shalt.err (%p595)
  %s598 = scalar_lea.sflag [#allocation3], 2
  %599 = vsyncmov %s598
  %s600 = vpop.sfrf %599
  %p601 = scmp.eq.s32.totalorder %s600, 0
  %p602 = pneg %p601
  %604 = shalt.err (%p602)
  %s605 = scalar_lea.sflag [#allocation3], 3
  %606 = vsyncmov %s605
  %s607 = vpop.sfrf %606
  %p608 = scmp.eq.s32.totalorder %s607, 0
  %p609 = pneg %p608
  %611 = shalt.err (%p609)
  %s612 = scalar_lea.sflag [#allocation3], 4
  %613 = vsyncmov %s612
  %s614 = vpop.sfrf %613
  %p615 = scmp.eq.s32.totalorder %s614, 0
  %p616 = pneg %p615
  %618 = shalt.err (%p616)
  %s619 = scalar_lea.sflag [#allocation3], 5
  %620 = vsyncmov %s619
  %s621 = vpop.sfrf %620
  %p622 = scmp.eq.s32.totalorder %s621, 0
  %p623 = pneg %p622
  %625 = shalt.err (%p623)

</llo_original>
